<compile_context>
chip_gen: v5e
topology: v5e:2x2
jax: 0.10.0
libtpu: 0.0.40
codegen_flags: <defaults>
</compile_context>

<pallas_src>
import math
import functools

import jax
import jax.numpy as jnp
from jax import lax
from jax.experimental import pallas as pl
from jax.experimental.pallas import tpu as pltpu


def _round_up(x, m):
    return (x + m - 1) // m * m


def _equal_linear_kernel(x_ref, w_ref, b_ref, o_ref, acc_ref, *,
                         scale, lr_mul, activation, n_valid):
    # Grid = (M tiles, N tiles, K tiles); K is the reduction ("arbitrary") axis.
    # x_ref: (bm, bk) bf16   w_ref: (bk, tn) bf16   b_ref: (1, tn) f32
    # o_ref: (bm, tn)        acc_ref: (bm, tn) f32 scratch
    k = pl.program_id(2)

    @pl.when(k == 0)
    def _():
        acc_ref[...] = jnp.zeros_like(acc_ref)

    # Native bf16 x bf16 -> f32 MXU contraction (no f32 emulation passes).
    acc_ref[...] += jnp.dot(x_ref[...], w_ref[...],
                            preferred_element_type=jnp.float32)

    @pl.when(k == pl.num_programs(2) - 1)
    def _():
        # scale is a scalar: scaling the f32 accumulator once is exact and
        # cheaper than scaling the weights.
        t = acc_ref[...] * scale + b_ref[...] * lr_mul
        if activation == 'fused_lrelu':
            out = jnp.maximum(t, 0.2 * t) * math.sqrt(2.0)
        elif activation == 'tanh':
            out = jnp.tanh(t)
        elif activation == 'sqrt_softmax':
            if n_valid < t.shape[-1]:
                # Mask lane-padding columns so they get zero probability.
                col = lax.broadcasted_iota(jnp.int32, t.shape, 1)
                t = jnp.where(col < n_valid, t, -jnp.inf)
            t = t - jnp.max(t, axis=-1, keepdims=True)
            e = jnp.exp(t)
            # sqrt(e / sum) == sqrt(e) * rsqrt(sum): divide/sqrt chain on the EUP.
            out = jnp.sqrt(e) * lax.rsqrt(jnp.sum(e, axis=-1, keepdims=True))
        else:
            out = t
        o_ref[...] = out.astype(o_ref.dtype)


def prepare_weight(weight, compute_dtype=jnp.bfloat16):
    """(out,in) -> transposed, lane-padded (K_pad, N_pad) weight in compute dtype.

    Call once per parameter (at init) and pass the result via prepared_weight=
    so the transpose/pad/cast is not re-done on every forward call.
    """
    N, K = weight.shape
    K_pad = max(_round_up(K, 128), 128)
    N_pad = max(_round_up(N, 128), 128)
    w_p = jnp.pad(jnp.transpose(weight, (1, 0)), ((0, K_pad - K), (0, N_pad - N)))
    return w_p.astype(compute_dtype)


def equal_linear(x, weight, bias=None, *, lr_mul=1.0, activation=None,
                 compute_dtype=jnp.bfloat16, prepared_weight=None):
    """Pallas implementation of EqualLinear.forward. x:(M,in), weight:(out,in)."""
    M, K = x.shape
    N, K_w = weight.shape
    assert K == K_w
    scale = lr_mul if K == 0 else (1.0 / math.sqrt(K)) * lr_mul

    if bias is None:
        bias = jnp.zeros((N,), jnp.float32)

    K_pad = max(_round_up(K, 128), 128)
    N_pad = max(_round_up(N, 128), 128)

    if prepared_weight is None:
        prepared_weight = prepare_weight(weight, compute_dtype)
    assert prepared_weight.shape == (K_pad, N_pad), prepared_weight.shape

    # Row tile: single tile for small batches, 512 rows for large batches.
    if M <= 512:
        bm = max(_round_up(M, 8), 8)
    else:
        bm = 512
    M_pad = _round_up(M, bm)

    # Column tile: sqrt_softmax needs the whole row resident (row reduction);
    # otherwise cap at 512 lanes (VMEM cap + lets the N axis shard across TCs).
    tn = N_pad if activation == 'sqrt_softmax' else min(N_pad, 512)
    # Reduction tile: cap so the (bk, tn) weight block stays small in VMEM.
    bk = min(K_pad, 512)

    x_p = jnp.pad(x, ((0, M_pad - M), (0, K_pad - K))).astype(compute_dtype)
    b_p = jnp.pad(bias.astype(jnp.float32), (0, N_pad - N)).reshape(1, N_pad)

    kernel = functools.partial(
        _equal_linear_kernel,
        scale=scale, lr_mul=lr_mul, activation=activation, n_valid=N)

    itemsize = jnp.dtype(compute_dtype).itemsize
    cost = pl.CostEstimate(
        flops=2 * M_pad * K_pad * N_pad,
        transcendentals=(2 * M_pad * N_pad
                         if activation in ('tanh', 'sqrt_softmax') else 0),
        bytes_accessed=(M_pad * K_pad * itemsize            # x
                        + K_pad * N_pad * itemsize          # weight
                        + N_pad * 4                         # bias
                        + M_pad * N_pad * jnp.dtype(x.dtype).itemsize),  # out
    )

    out_p = pl.pallas_call(
        kernel,
        out_shape=jax.ShapeDtypeStruct((M_pad, N_pad), x.dtype),
        grid_spec=pltpu.PrefetchScalarGridSpec(
            num_scalar_prefetch=0,
            grid=(M_pad // bm, N_pad // tn, K_pad // bk),
            in_specs=[
                pl.BlockSpec((bm, bk), lambda i, j, k: (i, k)),   # x tile
                pl.BlockSpec((bk, tn), lambda i, j, k: (k, j)),   # weight tile
                pl.BlockSpec((1, tn), lambda i, j, k: (0, j)),    # bias tile
            ],
            out_specs=pl.BlockSpec((bm, tn), lambda i, j, k: (i, j)),
            scratch_shapes=[pltpu.VMEM((bm, tn), jnp.float32)],   # f32 accumulator
        ),
        compiler_params=pltpu.CompilerParams(
            dimension_semantics=("parallel", "parallel", "arbitrary"),
            vmem_limit_bytes=32 * 1024 * 1024,
        ),
        cost_estimate=cost,
    )(x_p, prepared_weight, b_p)

    return out_p[:M, :N]


if __name__ == "__main__":
    key = jax.random.PRNGKey(0)
    kx, kw = jax.random.split(key)

    # Mapping-network-style FC layer, shrunk but lane-aligned.
    batch, in_dim, out_dim = 16, 256, 128
    lr_mul = 0.01
    x = jax.random.normal(kx, (batch, in_dim), jnp.float32)
    weight = jax.random.normal(kw, (out_dim, in_dim), jnp.float32) / lr_mul  # randn().div_(lr_mul)
    bias = jnp.zeros((out_dim,), jnp.float32)

    scale = (1.0 / math.sqrt(in_dim)) * lr_mul
    lin_ref = jnp.matmul(x, (weight * scale).T,
                         precision=lax.Precision.HIGHEST) + bias * lr_mul

    # 1) default (no activation) — bf16 operands, f32 accumulate.
    out0 = jax.block_until_ready(equal_linear(x, weight, bias,
                                              lr_mul=lr_mul, activation=None))
    assert out0.shape == (batch, out_dim), out0.shape
    assert jnp.allclose(out0, lin_ref, atol=3e-2, rtol=3e-2), \
        float(jnp.max(jnp.abs(out0 - lin_ref)))

    # 1b) same result via the hoisted/prepared-weight fast path.
    w_prep = prepare_weight(weight)
    out0b = jax.block_until_ready(equal_linear(x, weight, bias, lr_mul=lr_mul,
                                               activation=None,
                                               prepared_weight=w_prep))
    assert jnp.array_equal(out0, out0b)

    # 2) fused_lrelu
    out1 = jax.block_until_ready(equal_linear(x, weight, bias,
                                              lr_mul=lr_mul, activation='fused_lrelu'))
    ref1 = jnp.where(lin_ref >= 0.0, lin_ref, 0.2 * lin_ref) * math.sqrt(2.0)
    assert jnp.allclose(out1, ref1, atol=3e-2, rtol=3e-2), \
        float(jnp.max(jnp.abs(out1 - ref1)))

    # 3) sqrt_softmax with unaligned dims (exercises padding + softmax masking)
    b2, in2, out2 = 5, 96, 40
    x3 = jax.random.normal(jax.random.PRNGKey(1), (b2, in2), jnp.float32)
    w3 = jax.random.normal(jax.random.PRNGKey(2), (out2, in2), jnp.float32)
    bias3 = 0.1 * jnp.ones((out2,), jnp.float32)
    out3 = jax.block_until_ready(equal_linear(x3, w3, bias3,
                                              lr_mul=1.0, activation='sqrt_softmax'))
    logits = jnp.matmul(x3, (w3 * (1.0 / math.sqrt(in2))).T,
                        precision=lax.Precision.HIGHEST) + bias3
    ref3 = jnp.sqrt(jax.nn.softmax(logits, axis=1))
    assert out3.shape == (b2, out2), out3.shape
    assert jnp.allclose(out3, ref3, atol=1e-2, rtol=1e-2), \
        float(jnp.max(jnp.abs(out3 - ref3)))

    # 4) tanh
    out4 = jax.block_until_ready(equal_linear(x, weight, bias,
                                              lr_mul=lr_mul, activation='tanh'))
    assert jnp.allclose(out4, jnp.tanh(lin_ref), atol=3e-2, rtol=3e-2), \
        float(jnp.max(jnp.abs(out4 - jnp.tanh(lin_ref))))

    print("KERNEL_OK")
</pallas_src>

<mosaic_0001>
module attributes {stable_mosaic.version = 11 : i64} {
  func.func @_equal_linear_kernel(%arg0: i32, %arg1: i32, %arg2: i32, %arg3: memref<16x256xbf16, #tpu.memory_space<vmem>>, %arg4: memref<256x128xbf16, #tpu.memory_space<vmem>>, %arg5: memref<1x128xf32, #tpu.memory_space<vmem>>, %arg6: memref<16x128xf32, #tpu.memory_space<vmem>>, %arg7: memref<16x128xf32, #tpu.memory_space<vmem>>) attributes {dimension_semantics = [#tpu.dimension_semantics<parallel>, #tpu.dimension_semantics<parallel>, #tpu.dimension_semantics<arbitrary>], iteration_bounds = array<i64: 1, 1, 1>, scalar_prefetch = 0 : i64, scratch_operands = 1 : i64, tpu.core_type = #tpu.core_type<tc>, window_params = [{transform_indices = @transform_0, window_bounds = array<i64: 16, 256>}, {transform_indices = @transform_1, window_bounds = array<i64: 256, 128>}, {transform_indices = @transform_2, window_bounds = array<i64: 1, 128>}, {transform_indices = @transform_3, window_bounds = array<i64: 16, 128>}]} {
    %c0_i32 = arith.constant 0 : i32
    %0 = arith.cmpi eq, %arg2, %c0_i32 : i32
    %1 = arith.extui %0 : i1 to i32
    %c0_i32_0 = arith.constant 0 : i32
    %2 = arith.cmpi ne, %1, %c0_i32_0 : i32
    scf.if %2 {
      %cst_10 = arith.constant 0.000000e+00 : f32
      %12 = vector.broadcast %cst_10 : f32 to vector<16x128xf32>
      %c0_11 = arith.constant 0 : index
      %c0_12 = arith.constant 0 : index
      %13 = vector.load %arg7[%c0_11, %c0_12] : memref<16x128xf32, #tpu.memory_space<vmem>>, vector<16x128xf32>
      tpu.vector_store %arg7[%c0_11, %c0_12], %12 {strides = array<i32>} : memref<16x128xf32, #tpu.memory_space<vmem>>, vector<16x128xf32>,
    } else {
    }
    %c0 = arith.constant 0 : index
    %c0_1 = arith.constant 0 : index
    %3 = vector.load %arg7[%c0, %c0_1] : memref<16x128xf32, #tpu.memory_space<vmem>>, vector<16x128xf32>
    %c0_2 = arith.constant 0 : index
    %c0_3 = arith.constant 0 : index
    %4 = vector.load %arg3[%c0_2, %c0_3] : memref<16x256xbf16, #tpu.memory_space<vmem>>, vector<16x256xbf16>
    %c0_4 = arith.constant 0 : index
    %c0_5 = arith.constant 0 : index
    %5 = vector.load %arg4[%c0_4, %c0_5] : memref<256x128xbf16, #tpu.memory_space<vmem>>, vector<256x128xbf16>
    %cst = arith.constant dense<0.000000e+00> : vector<16x128xf32>
    %6 = tpu.matmul %4, %5, %cst {dimension_numbers = #tpu.dot_dimension_numbers<[1], [0], [0], [1], [0, 0, 1, 1], [], []>} : vector<16x256xbf16>, vector<256x128xbf16>, vector<16x128xf32> -> vector<16x128xf32>
    %7 = arith.addf %3, %6 : vector<16x128xf32>
    %c0_6 = arith.constant 0 : index
    %c0_7 = arith.constant 0 : index
    %8 = vector.load %arg7[%c0_6, %c0_7] : memref<16x128xf32, #tpu.memory_space<vmem>>, vector<16x128xf32>
    tpu.vector_store %arg7[%c0_6, %c0_7], %7 {strides = array<i32>} : memref<16x128xf32, #tpu.memory_space<vmem>>, vector<16x128xf32>,
    %c0_i32_8 = arith.constant 0 : i32
    %9 = arith.cmpi eq, %arg2, %c0_i32_8 : i32
    %10 = arith.extui %9 : i1 to i32
    %c0_i32_9 = arith.constant 0 : i32
    %11 = arith.cmpi ne, %10, %c0_i32_9 : i32
    scf.if %11 {
      %c0_10 = arith.constant 0 : index
      %c0_11 = arith.constant 0 : index
      %12 = vector.load %arg7[%c0_10, %c0_11] : memref<16x128xf32, #tpu.memory_space<vmem>>, vector<16x128xf32>
      %cst_12 = arith.constant 6.250000e-04 : f32
      %13 = vector.broadcast %cst_12 : f32 to vector<16x128xf32>
      %14 = arith.mulf %12, %13 : vector<16x128xf32>
      %c0_13 = arith.constant 0 : index
      %c0_14 = arith.constant 0 : index
      %15 = vector.load %arg5[%c0_13, %c0_14] : memref<1x128xf32, #tpu.memory_space<vmem>>, vector<1x128xf32>
      %cst_15 = arith.constant 0.00999999977 : f32
      %16 = vector.broadcast %cst_15 : f32 to vector<1x128xf32>
      %17 = arith.mulf %15, %16 : vector<1x128xf32>
      %18 = vector.broadcast %17 : vector<1x128xf32> to vector<16x128xf32>
      %19 = arith.addf %14, %18 : vector<16x128xf32>
      %c0_16 = arith.constant 0 : index
      %c0_17 = arith.constant 0 : index
      %20 = vector.load %arg6[%c0_16, %c0_17] : memref<16x128xf32, #tpu.memory_space<vmem>>, vector<16x128xf32>
      tpu.vector_store %arg6[%c0_16, %c0_17], %19 {strides = array<i32>} : memref<16x128xf32, #tpu.memory_space<vmem>>, vector<16x128xf32>,
    } else {
    }
    return
  }
  func.func @transform_0(%arg0: i32, %arg1: i32, %arg2: i32) -> (i32, i32) {
    %c0_i32 = arith.constant 0 : i32
    return %arg0, %arg2 : i32, i32
  }
  func.func @transform_1(%arg0: i32, %arg1: i32, %arg2: i32) -> (i32, i32) {
    %c0_i32 = arith.constant 0 : i32
    return %arg2, %arg1 : i32, i32
  }
  func.func @transform_2(%arg0: i32, %arg1: i32, %arg2: i32) -> (i32, i32) {
    %c0_i32 = arith.constant 0 : i32
    %c0_i32_0 = arith.constant 0 : i32
    return %c0_i32, %arg1 : i32, i32
  }
  func.func @transform_3(%arg0: i32, %arg1: i32, %arg2: i32) -> (i32, i32) {
    %c0_i32 = arith.constant 0 : i32
    return %arg0, %arg1 : i32, i32
  }
}

</mosaic_0001>

<llo_original>
// kernel: tpu_custom_call.1
$region0: #{tpu_custom_call.1}
  #allocation0 [shape = 'u32[]', space=smem, size = 0x4, offset = 0x4, fixed_abs, tag = 'smem constant byte address 0x4 - core index']
  #allocation1 [shape = 'u32[72,128]{1,0:T(1,128)}', space=vmem, size = 0x9000, scoped, tag = 'internal scratch']
  #allocation2 [shape = 'f32[16,128]{1,0:T(8,128)}', space=vmem, size = 0x2000, scoped, tag = 'scratch operand']
  %s0 = inlined_call_operand.hbm [shape: bf16[16,256], index: 0, kind: input, shape index: {}]
  %s1 = inlined_call_operand.hbm [shape: bf16[256,128], index: 1, kind: input, shape index: {}]
  %s2 = inlined_call_operand.vmem [shape: f32[1,128], index: 2, kind: input, shape index: {}]
  %s3 = inlined_call_operand.hbm [shape: f32[16,128], index: 3, kind: output, shape index: {}]
  %s4 = sld [smem:[#allocation0]]
  $region38: #{tpu_custom_call.1} parent=0
    _
  %s6 = ssub.s32 1, %s4
  %s7 = scalar_select 0, %s6, %s4
  $region1: #{tpu_custom_call.1} parent=0
    #allocation3 [shape = 'u8[8192]{0}', space=vmem, size = 0x2000, scoped, tag = 'input window, operand 0, single buffered']
    #allocation4 [shape = 's32[1]{0}', space=sflag, size = 0x4, scoped, tag = 'scoped memory for tpu_custom_call.1']
    #allocation5 [shape = 's32[1]{0}', space=sflag, size = 0x4, scoped, tag = 'scoped memory for tpu_custom_call.1']
    #allocation6 [shape = 'u8[65536]{0}', space=vmem, size = 0x10000, scoped, tag = 'input window, operand 1, single buffered']
    #allocation7 [shape = 's32[1]{0}', space=sflag, size = 0x4, scoped, tag = 'scoped memory for tpu_custom_call.1']
    #allocation8 [shape = 'u8[8192]{0}', space=vmem, size = 0x2000, scoped, tag = 'output window, operand 0, single buffered']
    %8 = vsyncpa [#allocation4], 0
    %9 = vsyncpa [#allocation7], 0
    %10 = vsyncpa [#allocation5], 0
    // Predicated region
    $region2: #{tpu_custom_call.1} parent=1 // pred_check
      _
    $region3: #{tpu_custom_call.1} parent=1 // pred_check_branch
      %12 = sbr.rel (0) target = $region5
    $region4: #{tpu_custom_call.1} parent=1 // pred_region
      %14 = vsyncadd [#allocation4], 0
      %s15 = sshll.u32 %s0, 4
      %s16 = int_to_ptr.hbm [resolvable:$true] %s15
      %s17 = sshll.u32 [#allocation3], 4
      %s18 = int_to_ptr.vmem [resolvable:$true] %s17
      %23 = dma.hbm_to_vmem [thread:$0]  %s16, 256, %s18, [#allocation4], 128, 128, 8
    $region5: #{tpu_custom_call.1} parent=1 // pred_fallthru
      _
    // Predicated region
    $region6: #{tpu_custom_call.1} parent=1 // pred_check
      _
    $region7: #{tpu_custom_call.1} parent=1 // pred_check_branch
      %25 = sbr.rel (0) target = $region9
    $region8: #{tpu_custom_call.1} parent=1 // pred_region
      %27 = vsyncadd [#allocation7], 0
      %s28 = sshll.u32 %s1, 4
      %s29 = int_to_ptr.hbm [resolvable:$true] %s28
      %s30 = sshll.u32 [#allocation6], 4
      %s31 = int_to_ptr.vmem [resolvable:$true] %s30
      %36 = dma.hbm_to_vmem [thread:$0]  %s29, 2048, %s31, [#allocation7], 64, 64, 4
    $region9: #{tpu_custom_call.1} parent=1 // pred_fallthru
      _
    // Predicated region
    $region10: #{tpu_custom_call.1} parent=1 // pred_check
      _
    $region11: #{tpu_custom_call.1} parent=1 // pred_check_branch
      %38 = sbr.rel (0) target = $region13
    $region12: #{tpu_custom_call.1} parent=1 // pred_region
      _
    $region13: #{tpu_custom_call.1} parent=1 // pred_fallthru
      _
    // Predicated region
    $region14: #{tpu_custom_call.1} parent=1 // pred_check
      _
    $region15: #{tpu_custom_call.1} parent=1 // pred_check_branch
      %40 = sbr.rel (0) target = $region17
    $region16: #{tpu_custom_call.1} parent=1 // pred_region
      %42 = dma.done [#allocation4], 256
    $region17: #{tpu_custom_call.1} parent=1 // pred_fallthru
      _
    // Predicated region
    $region18: #{tpu_custom_call.1} parent=1 // pred_check
      _
    $region19: #{tpu_custom_call.1} parent=1 // pred_check_branch
      %44 = sbr.rel (0) target = $region21
    $region20: #{tpu_custom_call.1} parent=1 // pred_region
      %46 = dma.done [#allocation7], 2048
    $region21: #{tpu_custom_call.1} parent=1 // pred_fallthru
      _
    %p47 = scmp.eq.s32.totalorder 0, 0
    // Predicated region
    $region22: #{tpu_custom_call.1} parent=1 // pred_check
      %p48 = pneg %p47
    $region23: #{tpu_custom_call.1} parent=1 // pred_check_branch
      %50 = sbr.rel (%p48) target = $region25
    $region24: #{tpu_custom_call.1} parent=1 // pred_region
      %51 = vst [vmem:[#allocation2] sm:$0xff] 0.0
      %52 = vst [vmem:[#allocation2 + $0x8] sm:$0xff] 0.0
    $region25: #{tpu_custom_call.1} parent=1 // pred_fallthru
      _
    %v53 = vld [vmem:[#allocation2] sm:$0xff]
    %v54 = vld [vmem:[#allocation2 + $0x8] sm:$0xff]
    %v55 = vld [vmem:[#allocation3] sm:$0xff]
    %v56 = vld [vmem:[#allocation3 + $0x8] sm:$0xff]
    %v57 = vld [vmem:[#allocation6] sm:$0xf]
    %v58 = vld [vmem:[#allocation6 + $0x4] sm:$0xf]
    %v59 = vld [vmem:[#allocation6 + $0x8] sm:$0xf]
    %v60 = vld [vmem:[#allocation6 + $0xc] sm:$0xf]
    %v61 = vld [vmem:[#allocation6 + $0x10] sm:$0xf]
    %v62 = vld [vmem:[#allocation6 + $0x14] sm:$0xf]
    %v63 = vld [vmem:[#allocation6 + $0x18] sm:$0xf]
    %v64 = vld [vmem:[#allocation6 + $0x1c] sm:$0xf]
    %v65 = vld [vmem:[#allocation6 + $0x20] sm:$0xf]
    %v66 = vld [vmem:[#allocation6 + $0x24] sm:$0xf]
    %v67 = vld [vmem:[#allocation6 + $0x28] sm:$0xf]
    %v68 = vld [vmem:[#allocation6 + $0x2c] sm:$0xf]
    %v69 = vld [vmem:[#allocation6 + $0x30] sm:$0xf]
    %v70 = vld [vmem:[#allocation6 + $0x34] sm:$0xf]
    %v71 = vld [vmem:[#allocation6 + $0x38] sm:$0xf]
    %v72 = vld [vmem:[#allocation6 + $0x3c] sm:$0xf]
    %v73 = vld [vmem:[#allocation6 + $0x40] sm:$0xf]
    %v74 = vld [vmem:[#allocation6 + $0x44] sm:$0xf]
    %v75 = vld [vmem:[#allocation6 + $0x48] sm:$0xf]
    %v76 = vld [vmem:[#allocation6 + $0x4c] sm:$0xf]
    %v77 = vld [vmem:[#allocation6 + $0x50] sm:$0xf]
    %v78 = vld [vmem:[#allocation6 + $0x54] sm:$0xf]
    %v79 = vld [vmem:[#allocation6 + $0x58] sm:$0xf]
    %v80 = vld [vmem:[#allocation6 + $0x5c] sm:$0xf]
    %v81 = vld [vmem:[#allocation6 + $0x60] sm:$0xf]
    %v82 = vld [vmem:[#allocation6 + $0x64] sm:$0xf]
    %v83 = vld [vmem:[#allocation6 + $0x68] sm:$0xf]
    %v84 = vld [vmem:[#allocation6 + $0x6c] sm:$0xf]
    %v85 = vld [vmem:[#allocation6 + $0x70] sm:$0xf]
    %v86 = vld [vmem:[#allocation6 + $0x74] sm:$0xf]
    %v87 = vld [vmem:[#allocation6 + $0x78] sm:$0xf]
    %v88 = vld [vmem:[#allocation6 + $0x7c] sm:$0xf]
    %v91 = vunpack.c.l.b16 %v55
    %v92 = vunpack.c.h.b16 %v55
    %v93 = vunpack.c.l.b16 %v56
    %v94 = vunpack.c.h.b16 %v56
    %v95 = vpack.c.b16 %v93, %v91
    %v96 = vpack.c.b16 %v94, %v92
    %v131 = vunpack.c.l.b16 %v57
    %v132 = vunpack.c.l.b16 %v58
    %v133 = vunpack.c.l.b16 %v59
    %v134 = vunpack.c.l.b16 %v60
    %v135 = vunpack.c.l.b16 %v61
    %v136 = vunpack.c.l.b16 %v62
    %v137 = vunpack.c.l.b16 %v63
    %v138 = vunpack.c.l.b16 %v64
    %v139 = vunpack.c.l.b16 %v65
    %v140 = vunpack.c.l.b16 %v66
    %v141 = vunpack.c.l.b16 %v67
    %v142 = vunpack.c.l.b16 %v68
    %v143 = vunpack.c.l.b16 %v69
    %v144 = vunpack.c.l.b16 %v70
    %v145 = vunpack.c.l.b16 %v71
    %v146 = vunpack.c.l.b16 %v72
    %v147 = vunpack.c.l.b16 %v73
    %v148 = vunpack.c.l.b16 %v74
    %v149 = vunpack.c.l.b16 %v75
    %v150 = vunpack.c.l.b16 %v76
    %v151 = vunpack.c.l.b16 %v77
    %v152 = vunpack.c.l.b16 %v78
    %v153 = vunpack.c.l.b16 %v79
    %v154 = vunpack.c.l.b16 %v80
    %v155 = vunpack.c.l.b16 %v81
    %v156 = vunpack.c.l.b16 %v82
    %v157 = vunpack.c.l.b16 %v83
    %v158 = vunpack.c.l.b16 %v84
    %v159 = vunpack.c.l.b16 %v85
    %v160 = vunpack.c.l.b16 %v86
    %v161 = vunpack.c.l.b16 %v87
    %v162 = vunpack.c.l.b16 %v88
    %v163 = vpack.c.b16 %v132, %v131
    %v164 = vpack.c.b16 %v134, %v133
    %v165 = vpack.c.b16 %v136, %v135
    %v166 = vpack.c.b16 %v138, %v137
    %v167 = vpack.c.b16 %v140, %v139
    %v168 = vpack.c.b16 %v142, %v141
    %v169 = vpack.c.b16 %v144, %v143
    %v170 = vpack.c.b16 %v146, %v145
    %v171 = vpack.c.b16 %v148, %v147
    %v172 = vpack.c.b16 %v150, %v149
    %v173 = vpack.c.b16 %v152, %v151
    %v174 = vpack.c.b16 %v154, %v153
    %v175 = vpack.c.b16 %v156, %v155
    %v176 = vpack.c.b16 %v158, %v157
    %v177 = vpack.c.b16 %v160, %v159
    %v178 = vpack.c.b16 %v162, %v161
    %195 = vmatpush.bf16.msra.mxu0 %v170
    %196 = vmatpush.bf16.msra.mxu0 %v169
    %197 = vmatpush.bf16.msra.mxu0 %v168
    %198 = vmatpush.bf16.msra.mxu0 %v167
    %199 = vmatpush.bf16.msra.mxu0 %v166
    %200 = vmatpush.bf16.msra.mxu0 %v165
    %201 = vmatpush.bf16.msra.mxu0 %v164
    %202 = vmatpush.bf16.msra.mxu0 %v163
    %203 = vmatmul.bf16.gmra.mxu0 %v95
    %v204 = vpop.f32.mrf.mxu0
    %v205 = vadd.f32 0.0, %v204
    %v206 = vpop.f32.mrf.mxu0
    %v207 = vadd.f32 0.0, %v206
    %208 = vdwg.mxu0
    %209 = vmatpush.bf16.msra.mxu0 %v178
    %210 = vmatpush.bf16.msra.mxu0 %v177
    %211 = vmatpush.bf16.msra.mxu0 %v176
    %212 = vmatpush.bf16.msra.mxu0 %v175
    %213 = vmatpush.bf16.msra.mxu0 %v174
    %214 = vmatpush.bf16.msra.mxu0 %v173
    %215 = vmatpush.bf16.msra.mxu0 %v172
    %216 = vmatpush.bf16.msra.mxu0 %v171
    %217 = vmatmul.bf16.gmra.mxu0 %v96
    %v218 = vpop.f32.mrf.mxu0
    %v219 = vadd.f32 %v205, %v218
    %v220 = vpop.f32.mrf.mxu0
    %v221 = vadd.f32 %v207, %v220
    %222 = vdwg.mxu0
    %v223 = vadd.f32 %v53, %v219
    %v224 = vadd.f32 %v54, %v221
    %225 = vst [vmem:[#allocation2] sm:$0xff] %v223
    %226 = vst [vmem:[#allocation2 + $0x8] sm:$0xff] %v224
    // Predicated region
    $region26: #{tpu_custom_call.1} parent=1 // pred_check
      %p227 = pneg %p47
    $region27: #{tpu_custom_call.1} parent=1 // pred_check_branch
      %229 = sbr.rel (%p227) target = $region29
    $region28: #{tpu_custom_call.1} parent=1 // pred_region
      %v230 = vld [vmem:[#allocation2] sm:$0xff]
      %v231 = vld [vmem:[#allocation2 + $0x8] sm:$0xff]
      %v232 = vmul.f32 %v230, 0.000625
      %v233 = vmul.f32 %v231, 0.000625
      %v234 = vld [vmem:[%s2] sm:$0x1]
      %v235 = vmul.f32 %v234, 0.01
      %v237 = vperm.slane %v235, 0
      %v239 = vadd.f32 %v232, %v237
      %v240 = vadd.f32 %v233, %v237
      %241 = vst [vmem:[#allocation8] sm:$0xff] %v239
      %242 = vst [vmem:[#allocation8 + $0x8] sm:$0xff] %v240
    $region29: #{tpu_custom_call.1} parent=1 // pred_fallthru
      _
    // Predicated region
    $region30: #{tpu_custom_call.1} parent=1 // pred_check
      _
    $region31: #{tpu_custom_call.1} parent=1 // pred_check_branch
      %244 = sbr.rel (0) target = $region33
    $region32: #{tpu_custom_call.1} parent=1 // pred_region
      %246 = vsyncadd [#allocation5], 0
      %s247 = sshll.u32 [#allocation8], 4
      %s248 = int_to_ptr.vmem [resolvable:$true] %s247
      %s249 = sshll.u32 %s3, 4
      %s250 = int_to_ptr.hbm [resolvable:$true] %s249
      %255 = dma.vmem_to_hbm [thread:$0]  %s248, 256, %s250, [#allocation5], 128, 128, 8
    $region33: #{tpu_custom_call.1} parent=1 // pred_fallthru
      _
    // Predicated region
    $region34: #{tpu_custom_call.1} parent=1 // pred_check
      _
    $region35: #{tpu_custom_call.1} parent=1 // pred_check_branch
      %257 = sbr.rel (0) target = $region37
    $region36: #{tpu_custom_call.1} parent=1 // pred_region
      %259 = dma.done [#allocation5], 256
    $region37: #{tpu_custom_call.1} parent=1 // pred_fallthru
      _
    %260 = vsyncpa [#allocation4], 1
    %261 = vsyncpa [#allocation7], 1
    %262 = vsyncpa [#allocation5], 1

</llo_original>
